<compile_context>
chip_gen: v6e
topology: v6e:2x2x1
jax: 0.10.0
libtpu: 0.0.40
codegen_flags: <defaults>
</compile_context>

<pallas_src>
import numpy as np

import jax
import jax.numpy as jnp
from jax.experimental import pallas as pl
from jax.experimental.pallas import tpu as pltpu


def _round_up(v, m):
    return (v + m - 1) // m * m


def _vmem_capacity_bytes():
    """Physical VMEM per TensorCore; conservative 64 MiB fallback (v7x)."""
    try:
        info = pltpu.get_tpu_info()
        cap = getattr(info, "vmem_capacity_bytes", None)
        if cap:
            return int(cap)
    except Exception:
        pass
    return 64 * 1024 * 1024


def _mean_agg_kernel(x_ref, neigh_ref, inv_cnt_ref, wx_ref, wn_ref,
                     out_x_ref, out_n_ref):
    # x_ref:       [TM, D_in]          bf16
    # neigh_ref:   [K, TM, D_in]       bf16  (neighbor-major, zero padded)
    # inv_cnt_ref: [TM, 1]             f32   (1 / true neighbor count, 0 if empty)
    # wx_ref:      [D_in, D_out_p]     bf16  (tranx.weight.T, maybe lane-padded)
    # wn_ref:      [D_in, D_out_p]     bf16  (trann.weight.T, maybe lane-padded)
    # out_x_ref:   [TM, D_out_p]       f32
    # out_n_ref:   [K, TM, D_out_p]    bf16
    kp, tm, d_in = neigh_ref.shape

    wx = wx_ref[...]
    wn = wn_ref[...]

    # One pass over the neighbor slab: each [TM, D_in] bf16 slice is read once
    # and feeds both (a) the per-neighbor MXU transform stored straight to its
    # output slice and (b) the f32 mean accumulation.  Only acc ([TM, D_in] f32)
    # stays live — no full-slab f32 intermediate.
    def neigh_step(j, acc):
        rows = neigh_ref[j]                                   # [TM, D_in] bf16
        out_n_ref[j] = jnp.dot(
            rows, wx, preferred_element_type=jnp.float32
        ).astype(out_n_ref.dtype)
        return acc + rows.astype(jnp.float32)

    acc = jnp.zeros((tm, d_in), jnp.float32)
    if kp <= 32:
        # Fully unrolled: LLO can schedule/overlap the K matmuls.
        for j in range(kp):
            acc = neigh_step(j, acc)
    else:
        acc = jax.lax.fori_loop(0, kp, neigh_step, acc)

    # Neighbor mean: zero-padded rows add nothing, so scaling the sum by the
    # precomputed reciprocal count reproduces torch's n.mean(dim=0).
    f = acc * inv_cnt_ref[...]                                # [TM, D_in] f32

    # x @ Wx + f @ Wn with f32 accumulation on the MXU (weights resident).
    out_x = (
        jnp.dot(x_ref[...], wx, preferred_element_type=jnp.float32)
        + jnp.dot(f.astype(jnp.bfloat16), wn, preferred_element_type=jnp.float32)
    )
    out_x_ref[...] = out_x.astype(out_x_ref.dtype)


def _choose_node_tile(n, kp, d_in, d_out_p, vmem_budget_bytes):
    """Largest multiple-of-16 node tile whose working set fits the budget."""
    # Streamed (double-buffered by the Pallas pipeline), per node:
    bytes_in = kp * d_in * 2 + d_in * 2 + 128 * 4      # bf16 neigh + bf16 x + f32 1/k (lane-padded)
    bytes_out = kp * d_out_p * 2 + d_out_p * 4         # bf16 neigh out + f32 x out
    stream = 2 * (bytes_in + bytes_out)
    # In-kernel f32 intermediates, per node: mean accumulator + current chunk
    # + MXU result buffers (previously un-budgeted).
    scratch = 2 * d_in * 4 + 3 * d_out_p * 4
    per_node = stream + scratch
    # Two resident bf16 weights, double-buffered (constant index_map => no re-DMA).
    weights = 2 * 2 * (d_in * d_out_p * 2)
    fixed = 2 * 1024 * 1024                            # compiler-internal scratch headroom
    avail = vmem_budget_bytes - weights - fixed
    tm = avail // max(per_node, 1)
    tm = int(max(16, min(2048, tm)) // 16 * 16)
    if n <= tm:                                        # tiny problems: one tile
        tm = _round_up(max(n, 1), 16)
    return tm


def mean_aggregator_pallas(x, neighbor_list, wx_t, wn_t):
    """x: [N, D_in]; neighbor_list: list of [k_i, D_in]; wx_t/wn_t: [D_in, D_out].

    Returns (x_out [N, D_out] f32, list of per-node [k_i, D_out] f32).
    """
    n, d_in = x.shape
    d_out = wx_t.shape[1]
    assert len(neighbor_list) == n and n > 0

    # ---- host-side packing (numpy, single pass; no per-node XLA ops) --------
    counts = np.array([int(nb.shape[0]) for nb in neighbor_list], dtype=np.int64)
    k_max = max(int(counts.max()), 1)
    kp = k_max                      # leading (untiled) axis: no 8/128 round-up needed

    # Lane-pad D_out only when it costs <= 25% extra bytes on the dominant
    # out_n write stream; otherwise keep exact width (masked stores are cheaper
    # than 128/d_out x more HBM writes for a write-bound kernel).
    d_out_128 = _round_up(d_out, 128)
    d_out_p = d_out_128 if d_out_128 * 4 <= d_out * 5 else d_out

    # Per-generation VMEM sizing: 128 MiB (v5e/v6e) vs 64 MiB (v7x).
    vmem_cap = _vmem_capacity_bytes()
    vmem_budget = (vmem_cap * 3) // 4          # 96 MiB / 48 MiB
    vmem_limit = (vmem_cap * 7) // 8           # 112 MiB / 56 MiB

    tm = _choose_node_tile(n, kp, d_in, d_out_p, vmem_budget)
    n_pad = _round_up(n, tm)
    grid = n_pad // tm

    x_host = np.zeros((n_pad, d_in), dtype=np.float32)
    x_host[:n] = np.asarray(x, dtype=np.float32)

    # Neighbor-major slab: neigh[j, i, :] = j-th neighbor of node i (0 if j >= k_i).
    neigh_host = np.zeros((kp, n_pad, d_in), dtype=np.float32)
    for i, nb in enumerate(neighbor_list):
        k = int(counts[i])
        if k:
            neigh_host[:k, i, :] = np.asarray(nb, dtype=np.float32)

    inv_cnt_host = np.zeros((n_pad, 1), dtype=np.float32)
    # Guard: zero-degree nodes give 0 (PyTorch's mean of an empty tensor is NaN).
    inv_cnt_host[:n, 0] = np.where(counts > 0, 1.0 / np.maximum(counts, 1), 0.0)

    wx_host = np.zeros((d_in, d_out_p), dtype=np.float32)
    wx_host[:, :d_out] = np.asarray(wx_t, dtype=np.float32)
    wn_host = np.zeros((d_in, d_out_p), dtype=np.float32)
    wn_host[:, :d_out] = np.asarray(wn_t, dtype=np.float32)

    # bf16 on the wire / in VMEM; f32 accumulation inside the kernel.
    x_dev = jnp.asarray(x_host, dtype=jnp.bfloat16)
    neigh_dev = jnp.asarray(neigh_host, dtype=jnp.bfloat16)
    inv_cnt_dev = jnp.asarray(inv_cnt_host)
    wx_dev = jnp.asarray(wx_host, dtype=jnp.bfloat16)
    wn_dev = jnp.asarray(wn_host, dtype=jnp.bfloat16)

    out_x, out_n = pl.pallas_call(
        _mean_agg_kernel,
        out_shape=(
            jax.ShapeDtypeStruct((n_pad, d_out_p), jnp.float32),
            jax.ShapeDtypeStruct((kp, n_pad, d_out_p), jnp.bfloat16),
        ),
        grid=(grid,),
        in_specs=[
            pl.BlockSpec((tm, d_in), lambda i: (i, 0)),            # x         (streamed)
            pl.BlockSpec((kp, tm, d_in), lambda i: (0, i, 0)),     # neighbors (streamed)
            pl.BlockSpec((tm, 1), lambda i: (i, 0)),               # 1/k       (streamed)
            pl.BlockSpec((d_in, d_out_p), lambda i: (0, 0)),       # Wx        (resident)
            pl.BlockSpec((d_in, d_out_p), lambda i: (0, 0)),       # Wn        (resident)
        ],
        out_specs=(
            pl.BlockSpec((tm, d_out_p), lambda i: (i, 0)),
            pl.BlockSpec((kp, tm, d_out_p), lambda i: (0, i, 0)),
        ),
        compiler_params=pltpu.CompilerParams(
            dimension_semantics=("parallel",),   # shards node tiles on v7x's 2 TCs
            vmem_limit_bytes=int(vmem_limit),
        ),
    )(x_dev, neigh_dev, inv_cnt_dev, wx_dev, wn_dev)

    # Strip D_out / N / K padding; slice the dense neighbor output lazily into
    # the PyTorch list-of-tensors return convention (cast back to f32 to match
    # the module's output dtype; values are bf16-accurate).
    x_out = out_x[:n, :d_out]
    neigh_out = [
        out_n[: int(counts[i]), i, :d_out].astype(jnp.float32) for i in range(n)
    ]
    return x_out, neigh_out


def _reference(x, neighbor_list, wx_t, wn_t):
    f = jnp.stack([nb.mean(axis=0) for nb in neighbor_list])
    x_out = x @ wx_t + f @ wn_t
    neigh_out = [nb @ wx_t for nb in neighbor_list]
    return x_out, neigh_out


if __name__ == "__main__":
    key = jax.random.PRNGKey(0)
    in_features, out_features = 32, 16
    n_nodes = 6
    neighbor_counts = [3, 5, 2, 4, 1, 5]

    k_x, k_wx, k_wn, *k_nb = jax.random.split(key, 3 + n_nodes)

    x = jax.random.normal(k_x, (n_nodes, in_features), dtype=jnp.float32)
    neighbor_list = [
        jax.random.normal(k_nb[i], (neighbor_counts[i], in_features),
                          dtype=jnp.float32)
        for i in range(n_nodes)
    ]

    # PyTorch Linear(in, out, bias=False) stores weight as [out, in] and
    # computes x @ W.T — we pass W.T = [in, out].
    wx = jax.random.normal(k_wx, (out_features, in_features), dtype=jnp.float32) * 0.1
    wn = jax.random.normal(k_wn, (out_features, in_features), dtype=jnp.float32) * 0.1
    wx_t, wn_t = wx.T, wn.T

    out_x, out_neigh = mean_aggregator_pallas(x, neighbor_list, wx_t, wn_t)
    jax.block_until_ready(out_x)
    for o in out_neigh:
        jax.block_until_ready(o)

    ref_x, ref_neigh = _reference(x, neighbor_list, wx_t, wn_t)
    # bf16 matmul inputs + bf16 neighbor outputs (f32 accumulation) => relaxed
    # tolerance vs the f32 reference.
    assert jnp.allclose(out_x, ref_x, atol=3e-2, rtol=3e-2)
    for a, b in zip(out_neigh, ref_neigh):
        assert a.shape == b.shape
        assert jnp.allclose(a, b, atol=3e-2, rtol=3e-2)

    print("KERNEL_OK")
</pallas_src>

<mosaic_0001>
module attributes {stable_mosaic.version = 11 : i64} {
  func.func @_mean_agg_kernel(%arg0: i32, %arg1: memref<16x32xbf16, #tpu.memory_space<vmem>>, %arg2: memref<5x16x32xbf16, #tpu.memory_space<vmem>>, %arg3: memref<16x1xf32, #tpu.memory_space<vmem>>, %arg4: memref<32x16xbf16, #tpu.memory_space<vmem>>, %arg5: memref<32x16xbf16, #tpu.memory_space<vmem>>, %arg6: memref<16x16xf32, #tpu.memory_space<vmem>>, %arg7: memref<5x16x16xbf16, #tpu.memory_space<vmem>>) attributes {dimension_semantics = [#tpu.dimension_semantics<parallel>], iteration_bounds = array<i64: 1>, scalar_prefetch = 0 : i64, scratch_operands = 0 : i64, tpu.core_type = #tpu.core_type<tc>, window_params = [{transform_indices = @transform_0, window_bounds = array<i64: 16, 32>}, {transform_indices = @transform_1, window_bounds = array<i64: 5, 16, 32>}, {transform_indices = @transform_2, window_bounds = array<i64: 16, 1>}, {pipeline_mode = #tpu.pipeline_mode<synchronous>, transform_indices = @transform_3, window_bounds = array<i64: 32, 16>}, {pipeline_mode = #tpu.pipeline_mode<synchronous>, transform_indices = @transform_4, window_bounds = array<i64: 32, 16>}, {transform_indices = @transform_5, window_bounds = array<i64: 16, 16>}, {transform_indices = @transform_6, window_bounds = array<i64: 5, 16, 16>}]} {
    %c0 = arith.constant 0 : index
    %c0_0 = arith.constant 0 : index
    %0 = vector.load %arg4[%c0, %c0_0] : memref<32x16xbf16, #tpu.memory_space<vmem>>, vector<32x16xbf16>
    %c0_1 = arith.constant 0 : index
    %c0_2 = arith.constant 0 : index
    %1 = vector.load %arg5[%c0_1, %c0_2] : memref<32x16xbf16, #tpu.memory_space<vmem>>, vector<32x16xbf16>
    %cst = arith.constant 0.000000e+00 : f32
    %2 = vector.broadcast %cst : f32 to vector<16x32xf32>
    %c0_3 = arith.constant 0 : index
    %c0_4 = arith.constant 0 : index
    %c0_5 = arith.constant 0 : index
    %3 = vector.load %arg2[%c0_3, %c0_4, %c0_5] : memref<5x16x32xbf16, #tpu.memory_space<vmem>>, vector<1x16x32xbf16>
    %4 = vector.shape_cast %3 : vector<1x16x32xbf16> to vector<16x32xbf16>
    %cst_6 = arith.constant dense<0.000000e+00> : vector<16x16xf32>
    %5 = tpu.matmul %4, %0, %cst_6 {dimension_numbers = #tpu.dot_dimension_numbers<[1], [0], [0], [1], [0, 0, 1, 1], [], []>} : vector<16x32xbf16>, vector<32x16xbf16>, vector<16x16xf32> -> vector<16x16xf32>
    %6 = arith.truncf %5 : vector<16x16xf32> to vector<16x16xbf16>
    %c0_7 = arith.constant 0 : index
    %c0_8 = arith.constant 0 : index
    %c0_9 = arith.constant 0 : index
    %7 = vector.load %arg7[%c0_7, %c0_8, %c0_9] : memref<5x16x16xbf16, #tpu.memory_space<vmem>>, vector<1x16x16xbf16>
    %8 = vector.shape_cast %7 : vector<1x16x16xbf16> to vector<16x16xbf16>
    %9 = vector.shape_cast %6 : vector<16x16xbf16> to vector<1x16x16xbf16>
    tpu.vector_store %arg7[%c0_7, %c0_8, %c0_9], %9 {strides = array<i32>} : memref<5x16x16xbf16, #tpu.memory_space<vmem>>, vector<1x16x16xbf16>,
    %10 = arith.extf %4 : vector<16x32xbf16> to vector<16x32xf32>
    %11 = arith.addf %2, %10 : vector<16x32xf32>
    %c1 = arith.constant 1 : index
    %c0_10 = arith.constant 0 : index
    %c0_11 = arith.constant 0 : index
    %12 = vector.load %arg2[%c1, %c0_10, %c0_11] : memref<5x16x32xbf16, #tpu.memory_space<vmem>>, vector<1x16x32xbf16>
    %13 = vector.shape_cast %12 : vector<1x16x32xbf16> to vector<16x32xbf16>
    %cst_12 = arith.constant dense<0.000000e+00> : vector<16x16xf32>
    %14 = tpu.matmul %13, %0, %cst_12 {dimension_numbers = #tpu.dot_dimension_numbers<[1], [0], [0], [1], [0, 0, 1, 1], [], []>} : vector<16x32xbf16>, vector<32x16xbf16>, vector<16x16xf32> -> vector<16x16xf32>
    %15 = arith.truncf %14 : vector<16x16xf32> to vector<16x16xbf16>
    %c1_13 = arith.constant 1 : index
    %c0_14 = arith.constant 0 : index
    %c0_15 = arith.constant 0 : index
    %16 = vector.load %arg7[%c1_13, %c0_14, %c0_15] : memref<5x16x16xbf16, #tpu.memory_space<vmem>>, vector<1x16x16xbf16>
    %17 = vector.shape_cast %16 : vector<1x16x16xbf16> to vector<16x16xbf16>
    %18 = vector.shape_cast %15 : vector<16x16xbf16> to vector<1x16x16xbf16>
    tpu.vector_store %arg7[%c1_13, %c0_14, %c0_15], %18 {strides = array<i32>} : memref<5x16x16xbf16, #tpu.memory_space<vmem>>, vector<1x16x16xbf16>,
    %19 = arith.extf %13 : vector<16x32xbf16> to vector<16x32xf32>
    %20 = arith.addf %11, %19 : vector<16x32xf32>
    %c2 = arith.constant 2 : index
    %c0_16 = arith.constant 0 : index
    %c0_17 = arith.constant 0 : index
    %21 = vector.load %arg2[%c2, %c0_16, %c0_17] : memref<5x16x32xbf16, #tpu.memory_space<vmem>>, vector<1x16x32xbf16>
    %22 = vector.shape_cast %21 : vector<1x16x32xbf16> to vector<16x32xbf16>
    %cst_18 = arith.constant dense<0.000000e+00> : vector<16x16xf32>
    %23 = tpu.matmul %22, %0, %cst_18 {dimension_numbers = #tpu.dot_dimension_numbers<[1], [0], [0], [1], [0, 0, 1, 1], [], []>} : vector<16x32xbf16>, vector<32x16xbf16>, vector<16x16xf32> -> vector<16x16xf32>
    %24 = arith.truncf %23 : vector<16x16xf32> to vector<16x16xbf16>
    %c2_19 = arith.constant 2 : index
    %c0_20 = arith.constant 0 : index
    %c0_21 = arith.constant 0 : index
    %25 = vector.load %arg7[%c2_19, %c0_20, %c0_21] : memref<5x16x16xbf16, #tpu.memory_space<vmem>>, vector<1x16x16xbf16>
    %26 = vector.shape_cast %25 : vector<1x16x16xbf16> to vector<16x16xbf16>
    %27 = vector.shape_cast %24 : vector<16x16xbf16> to vector<1x16x16xbf16>
    tpu.vector_store %arg7[%c2_19, %c0_20, %c0_21], %27 {strides = array<i32>} : memref<5x16x16xbf16, #tpu.memory_space<vmem>>, vector<1x16x16xbf16>,
    %28 = arith.extf %22 : vector<16x32xbf16> to vector<16x32xf32>
    %29 = arith.addf %20, %28 : vector<16x32xf32>
    %c3 = arith.constant 3 : index
    %c0_22 = arith.constant 0 : index
    %c0_23 = arith.constant 0 : index
    %30 = vector.load %arg2[%c3, %c0_22, %c0_23] : memref<5x16x32xbf16, #tpu.memory_space<vmem>>, vector<1x16x32xbf16>
    %31 = vector.shape_cast %30 : vector<1x16x32xbf16> to vector<16x32xbf16>
    %cst_24 = arith.constant dense<0.000000e+00> : vector<16x16xf32>
    %32 = tpu.matmul %31, %0, %cst_24 {dimension_numbers = #tpu.dot_dimension_numbers<[1], [0], [0], [1], [0, 0, 1, 1], [], []>} : vector<16x32xbf16>, vector<32x16xbf16>, vector<16x16xf32> -> vector<16x16xf32>
    %33 = arith.truncf %32 : vector<16x16xf32> to vector<16x16xbf16>
    %c3_25 = arith.constant 3 : index
    %c0_26 = arith.constant 0 : index
    %c0_27 = arith.constant 0 : index
    %34 = vector.load %arg7[%c3_25, %c0_26, %c0_27] : memref<5x16x16xbf16, #tpu.memory_space<vmem>>, vector<1x16x16xbf16>
    %35 = vector.shape_cast %34 : vector<1x16x16xbf16> to vector<16x16xbf16>
    %36 = vector.shape_cast %33 : vector<16x16xbf16> to vector<1x16x16xbf16>
    tpu.vector_store %arg7[%c3_25, %c0_26, %c0_27], %36 {strides = array<i32>} : memref<5x16x16xbf16, #tpu.memory_space<vmem>>, vector<1x16x16xbf16>,
    %37 = arith.extf %31 : vector<16x32xbf16> to vector<16x32xf32>
    %38 = arith.addf %29, %37 : vector<16x32xf32>
    %c4 = arith.constant 4 : index
    %c0_28 = arith.constant 0 : index
    %c0_29 = arith.constant 0 : index
    %39 = vector.load %arg2[%c4, %c0_28, %c0_29] : memref<5x16x32xbf16, #tpu.memory_space<vmem>>, vector<1x16x32xbf16>
    %40 = vector.shape_cast %39 : vector<1x16x32xbf16> to vector<16x32xbf16>
    %cst_30 = arith.constant dense<0.000000e+00> : vector<16x16xf32>
    %41 = tpu.matmul %40, %0, %cst_30 {dimension_numbers = #tpu.dot_dimension_numbers<[1], [0], [0], [1], [0, 0, 1, 1], [], []>} : vector<16x32xbf16>, vector<32x16xbf16>, vector<16x16xf32> -> vector<16x16xf32>
    %42 = arith.truncf %41 : vector<16x16xf32> to vector<16x16xbf16>
    %c4_31 = arith.constant 4 : index
    %c0_32 = arith.constant 0 : index
    %c0_33 = arith.constant 0 : index
    %43 = vector.load %arg7[%c4_31, %c0_32, %c0_33] : memref<5x16x16xbf16, #tpu.memory_space<vmem>>, vector<1x16x16xbf16>
    %44 = vector.shape_cast %43 : vector<1x16x16xbf16> to vector<16x16xbf16>
    %45 = vector.shape_cast %42 : vector<16x16xbf16> to vector<1x16x16xbf16>
    tpu.vector_store %arg7[%c4_31, %c0_32, %c0_33], %45 {strides = array<i32>} : memref<5x16x16xbf16, #tpu.memory_space<vmem>>, vector<1x16x16xbf16>,
    %46 = arith.extf %40 : vector<16x32xbf16> to vector<16x32xf32>
    %47 = arith.addf %38, %46 : vector<16x32xf32>
    %c0_34 = arith.constant 0 : index
    %c0_35 = arith.constant 0 : index
    %48 = vector.load %arg3[%c0_34, %c0_35] : memref<16x1xf32, #tpu.memory_space<vmem>>, vector<16x1xf32>
    %49 = vector.broadcast %48 : vector<16x1xf32> to vector<16x32xf32>
    %50 = arith.mulf %47, %49 : vector<16x32xf32>
    %c0_36 = arith.constant 0 : index
    %c0_37 = arith.constant 0 : index
    %51 = vector.load %arg1[%c0_36, %c0_37] : memref<16x32xbf16, #tpu.memory_space<vmem>>, vector<16x32xbf16>
    %cst_38 = arith.constant dense<0.000000e+00> : vector<16x16xf32>
    %52 = tpu.matmul %51, %0, %cst_38 {dimension_numbers = #tpu.dot_dimension_numbers<[1], [0], [0], [1], [0, 0, 1, 1], [], []>} : vector<16x32xbf16>, vector<32x16xbf16>, vector<16x16xf32> -> vector<16x16xf32>
    %53 = arith.truncf %50 : vector<16x32xf32> to vector<16x32xbf16>
    %cst_39 = arith.constant dense<0.000000e+00> : vector<16x16xf32>
    %54 = tpu.matmul %53, %1, %cst_39 {dimension_numbers = #tpu.dot_dimension_numbers<[1], [0], [0], [1], [0, 0, 1, 1], [], []>} : vector<16x32xbf16>, vector<32x16xbf16>, vector<16x16xf32> -> vector<16x16xf32>
    %55 = arith.addf %52, %54 : vector<16x16xf32>
    %c0_40 = arith.constant 0 : index
    %c0_41 = arith.constant 0 : index
    %56 = vector.load %arg6[%c0_40, %c0_41] : memref<16x16xf32, #tpu.memory_space<vmem>>, vector<16x16xf32>
    tpu.vector_store %arg6[%c0_40, %c0_41], %55 {strides = array<i32>} : memref<16x16xf32, #tpu.memory_space<vmem>>, vector<16x16xf32>,
    return
  }
  func.func @transform_0(%arg0: i32) -> (i32, i32) {
    %c0_i32 = arith.constant 0 : i32
    %c0_i32_0 = arith.constant 0 : i32
    return %arg0, %c0_i32 : i32, i32
  }
  func.func @transform_1(%arg0: i32) -> (i32, i32, i32) {
    %c0_i32 = arith.constant 0 : i32
    %c0_i32_0 = arith.constant 0 : i32
    %c0_i32_1 = arith.constant 0 : i32
    return %c0_i32, %arg0, %c0_i32_0 : i32, i32, i32
  }
  func.func @transform_2(%arg0: i32) -> (i32, i32) {
    %c0_i32 = arith.constant 0 : i32
    %c0_i32_0 = arith.constant 0 : i32
    return %arg0, %c0_i32 : i32, i32
  }
  func.func @transform_3(%arg0: i32) -> (i32, i32) {
    %c0_i32 = arith.constant 0 : i32
    %c0_i32_0 = arith.constant 0 : i32
    %c0_i32_1 = arith.constant 0 : i32
    return %c0_i32, %c0_i32_0 : i32, i32
  }
  func.func @transform_4(%arg0: i32) -> (i32, i32) {
    %c0_i32 = arith.constant 0 : i32
    %c0_i32_0 = arith.constant 0 : i32
    %c0_i32_1 = arith.constant 0 : i32
    return %c0_i32, %c0_i32_0 : i32, i32
  }
  func.func @transform_5(%arg0: i32) -> (i32, i32) {
    %c0_i32 = arith.constant 0 : i32
    %c0_i32_0 = arith.constant 0 : i32
    return %arg0, %c0_i32 : i32, i32
  }
  func.func @transform_6(%arg0: i32) -> (i32, i32, i32) {
    %c0_i32 = arith.constant 0 : i32
    %c0_i32_0 = arith.constant 0 : i32
    %c0_i32_1 = arith.constant 0 : i32
    return %c0_i32, %arg0, %c0_i32_0 : i32, i32, i32
  }
}

</mosaic_0001>

<llo_original>
// kernel: tpu_custom_call.1
$region0: #{tpu_custom_call.1}
  #allocation0 [shape = 'u32[]', space=smem, size = 0x4, offset = 0x4, fixed_abs, tag = 'smem constant byte address 0x4 - core index']
  #allocation1 [shape = 'u32[144,128]{1,0:T(1,128)}', space=vmem, size = 0x12000, scoped, tag = 'internal scratch']
  %s0 = inlined_call_operand.vmem [shape: bf16[16,32], index: 0, kind: input, shape index: {}]
  %s1 = inlined_call_operand.vmem [shape: bf16[5,16,32], index: 1, kind: input, shape index: {}]
  %s2 = inlined_call_operand.vmem [shape: f32[16,1], index: 2, kind: input, shape index: {}]
  %s3 = inlined_call_operand.vmem [shape: bf16[32,16], index: 3, kind: input, shape index: {}]
  %s4 = inlined_call_operand.vmem [shape: bf16[32,16], index: 4, kind: input, shape index: {}]
  %s5 = inlined_call_operand.hbm [shape: f32[16,16], index: 5, kind: output, shape index: {0}]
  %s6 = inlined_call_operand.hbm [shape: bf16[5,16,16], index: 6, kind: output, shape index: {1}]
  %7 = xla_tuple %s5, %s6
  %s8 = sld [smem:[#allocation0]]
  $region38: #{tpu_custom_call.1} parent=0
    _
  %s10 = ssub.s32 1, %s8
  %s11 = scalar_select 0, %s10, %s8
  $region1: #{tpu_custom_call.1} parent=0
    #allocation2 [shape = 'u8[8192]{0}', space=vmem, size = 0x2000, scoped, tag = 'output window, operand 0, single buffered']
    #allocation3 [shape = 's32[1]{0}', space=sflag, size = 0x4, scoped, tag = 'scoped memory for tpu_custom_call.1']
    #allocation4 [shape = 'u8[20480]{0}', space=vmem, size = 0x5000, scoped, tag = 'output window, operand 1, single buffered']
    #allocation5 [shape = 's32[1]{0}', space=sflag, size = 0x4, scoped, tag = 'scoped memory for tpu_custom_call.1']
    %12 = vsyncpa [#allocation3], 0
    %13 = vsyncpa [#allocation5], 0
    // Predicated region
    $region2: #{tpu_custom_call.1} parent=1 // pred_check
      _
    $region3: #{tpu_custom_call.1} parent=1 // pred_check_branch
      %15 = sbr.rel (0) target = $region5
    $region4: #{tpu_custom_call.1} parent=1 // pred_region
      _
    $region5: #{tpu_custom_call.1} parent=1 // pred_fallthru
      _
    // Predicated region
    $region6: #{tpu_custom_call.1} parent=1 // pred_check
      _
    $region7: #{tpu_custom_call.1} parent=1 // pred_check_branch
      %17 = sbr.rel (0) target = $region9
    $region8: #{tpu_custom_call.1} parent=1 // pred_region
      _
    $region9: #{tpu_custom_call.1} parent=1 // pred_fallthru
      _
    // Predicated region
    $region10: #{tpu_custom_call.1} parent=1 // pred_check
      _
    $region11: #{tpu_custom_call.1} parent=1 // pred_check_branch
      %19 = sbr.rel (0) target = $region13
    $region12: #{tpu_custom_call.1} parent=1 // pred_region
      _
    $region13: #{tpu_custom_call.1} parent=1 // pred_fallthru
      _
    // Predicated region
    $region14: #{tpu_custom_call.1} parent=1 // pred_check
      _
    $region15: #{tpu_custom_call.1} parent=1 // pred_check_branch
      %21 = sbr.rel (0) target = $region17
    $region16: #{tpu_custom_call.1} parent=1 // pred_region
      _
    $region17: #{tpu_custom_call.1} parent=1 // pred_fallthru
      _
    // Predicated region
    $region18: #{tpu_custom_call.1} parent=1 // pred_check
      _
    $region19: #{tpu_custom_call.1} parent=1 // pred_check_branch
      %23 = sbr.rel (0) target = $region21
    $region20: #{tpu_custom_call.1} parent=1 // pred_region
      _
    $region21: #{tpu_custom_call.1} parent=1 // pred_fallthru
      _
    %v25 = vld [vmem:[%s3] sm:$0xf]
    %v26 = vld [vmem:[%s3 + $0x4] sm:$0xf]
    %v27 = vld [vmem:[%s3 + $0x8] sm:$0xf]
    %v28 = vld [vmem:[%s3 + $0xc] sm:$0xf]
    %v29 = vld [vmem:[%s4] sm:$0xf]
    %v30 = vld [vmem:[%s4 + $0x4] sm:$0xf]
    %v31 = vld [vmem:[%s4 + $0x8] sm:$0xf]
    %v32 = vld [vmem:[%s4 + $0xc] sm:$0xf]
    %v33 = vld [vmem:[%s1] sm:$0xf]
    %v34 = vld [vmem:[%s1 + $0x4] sm:$0xf]
    %v37 = vunpack.c.l.b16 %v33
    %v38 = vunpack.c.l.b16 %v34
    %v39 = vpack.c.b16 %v38, %v37
    %v44 = vunpack.c.l.b16 %v25
    %v45 = vunpack.c.l.b16 %v26
    %v46 = vunpack.c.l.b16 %v27
    %v47 = vunpack.c.l.b16 %v28
    %v48 = vpack.c.b16 %v45, %v44
    %v49 = vpack.c.b16 %v47, %v46
    %vm52 = vcmask 261120
    %v54 = vsel %vm52, %v39, 0
    %56 = vmatprep.subr.bf16.mxu0 0
    %57 = vmatpush1.bf16.msra.mxu0 0
    %58 = vmatprep.subr.bf16.mxu0 0
    %59 = vmatpush1.bf16.msra.mxu0 0
    %60 = vmatprep.subr.bf16.mxu0 0
    %61 = vmatpush1.bf16.msra.mxu0 0
    %62 = vmatprep.subr.bf16.mxu0 0
    %63 = vmatpush1.bf16.msra.mxu0 0
    %64 = vmatprep.subr.bf16.mxu0 0
    %65 = vmatpush1.bf16.msra.mxu0 0
    %66 = vmatprep.subr.bf16.mxu0 0
    %67 = vmatpush1.bf16.msra.mxu0 0
    %68 = vmatprep.subr.bf16.mxu0 0
    %69 = vmatpush1.bf16.msra.mxu0 %v49
    %70 = vmatprep.subr.bf16.mxu0 0
    %71 = vmatpush1.bf16.msra.mxu0 %v48
    %72 = vmatprep.subr.bf16.mxu0 0
    %73 = vmatpush2.bf16.msra.mxu0 0
    %74 = vmatprep.subr.bf16.mxu0 0
    %75 = vmatpush2.bf16.msra.mxu0 0
    %76 = vmatprep.subr.bf16.mxu0 0
    %77 = vmatpush2.bf16.msra.mxu0 0
    %78 = vmatprep.subr.bf16.mxu0 0
    %79 = vmatpush2.bf16.msra.mxu0 0
    %80 = vmatprep.subr.bf16.mxu0 0
    %81 = vmatpush2.bf16.msra.mxu0 0
    %82 = vmatprep.subr.bf16.mxu0 0
    %83 = vmatpush2.bf16.msra.mxu0 0
    %84 = vmatprep.subr.bf16.mxu0 0
    %85 = vmatpush2.bf16.msra.mxu0 0
    %86 = vmatprep.subr.bf16.mxu0 0
    %87 = vmatpush2.bf16.msra.mxu0 0
    %88 = vmatprep.mubr.bf16.mxu0 0
    %89 = vmatmul.mubr.bf16.gmra.mxu0 %v54
    %v90 = vpop.f32.mrf.mxu0
    %v91 = vadd.f32 0.0, %v90
    %v92 = vpop.f32.mrf.mxu0
    %v93 = vpop.f32.mrf.mxu0
    %v94 = vadd.f32 0.0, %v93
    %v95 = vpop.f32.mrf.mxu0
    %96 = vdwg.mxu0
    %v97 = vpack.c.bf16 %v94, %v91
    %v99 = vunpack.c.l.b16 %v97
    %v100 = vunpack.c.h.b16 %v97
    %v101 = vpack.c.b16 %v99, %v99
    %v102 = vpack.c.b16 %v100, %v100
    %vm105 = vcmask 125952
    %106 = vst.msk [vmem:[#allocation4] sm:$0xf] %vm105, %v101
    %107 = vst.msk [vmem:[#allocation4 + $0x4] sm:$0xf] %vm105, %v102
    %v108 = vunpack.c.l.bf16 %v33
    %v109 = vunpack.c.l.bf16 %v34
    %v110 = vadd.f32 %v108, 0.0
    %v111 = vadd.f32 %v109, 0.0
    %s112 = scalar_lea.vmem %s1, 8
    %v113 = vld [vmem:[%s112] sm:$0xf]
    %v114 = vld [vmem:[%s112 + $0x4] sm:$0xf]
    %v117 = vunpack.c.l.b16 %v113
    %v118 = vunpack.c.l.b16 %v114
    %v119 = vpack.c.b16 %v118, %v117
    %v121 = vsel %vm52, %v119, 0
    %123 = vmatprep.subr.bf16.mxu0 0
    %124 = vmatpush1.bf16.msra.mxu0 0
    %125 = vmatprep.subr.bf16.mxu0 0
    %126 = vmatpush1.bf16.msra.mxu0 0
    %127 = vmatprep.subr.bf16.mxu0 0
    %128 = vmatpush1.bf16.msra.mxu0 0
    %129 = vmatprep.subr.bf16.mxu0 0
    %130 = vmatpush1.bf16.msra.mxu0 0
    %131 = vmatprep.subr.bf16.mxu0 0
    %132 = vmatpush1.bf16.msra.mxu0 0
    %133 = vmatprep.subr.bf16.mxu0 0
    %134 = vmatpush1.bf16.msra.mxu0 0
    %135 = vmatprep.subr.bf16.mxu0 0
    %136 = vmatpush1.bf16.msra.mxu0 %v49
    %137 = vmatprep.subr.bf16.mxu0 0
    %138 = vmatpush1.bf16.msra.mxu0 %v48
    %139 = vmatprep.subr.bf16.mxu0 0
    %140 = vmatpush2.bf16.msra.mxu0 0
    %141 = vmatprep.subr.bf16.mxu0 0
    %142 = vmatpush2.bf16.msra.mxu0 0
    %143 = vmatprep.subr.bf16.mxu0 0
    %144 = vmatpush2.bf16.msra.mxu0 0
    %145 = vmatprep.subr.bf16.mxu0 0
    %146 = vmatpush2.bf16.msra.mxu0 0
    %147 = vmatprep.subr.bf16.mxu0 0
    %148 = vmatpush2.bf16.msra.mxu0 0
    %149 = vmatprep.subr.bf16.mxu0 0
    %150 = vmatpush2.bf16.msra.mxu0 0
    %151 = vmatprep.subr.bf16.mxu0 0
    %152 = vmatpush2.bf16.msra.mxu0 0
    %153 = vmatprep.subr.bf16.mxu0 0
    %154 = vmatpush2.bf16.msra.mxu0 0
    %155 = vmatprep.mubr.bf16.mxu0 0
    %156 = vmatmul.mubr.bf16.gmra.mxu0 %v121
    %v157 = vpop.f32.mrf.mxu0
    %v158 = vadd.f32 0.0, %v157
    %v159 = vpop.f32.mrf.mxu0
    %v160 = vpop.f32.mrf.mxu0
    %v161 = vadd.f32 0.0, %v160
    %v162 = vpop.f32.mrf.mxu0
    %163 = vdwg.mxu0
    %v164 = vpack.c.bf16 %v161, %v158
    %v166 = vunpack.c.l.b16 %v164
    %v167 = vunpack.c.h.b16 %v164
    %v168 = vpack.c.b16 %v166, %v166
    %v169 = vpack.c.b16 %v167, %v167
    %s172 = scalar_lea.vmem [#allocation4], 8
    %173 = vst.msk [vmem:[%s172] sm:$0xf] %vm105, %v168
    %174 = vst.msk [vmem:[%s172 + $0x4] sm:$0xf] %vm105, %v169
    %v175 = vunpack.c.l.bf16 %v113
    %v176 = vunpack.c.l.bf16 %v114
    %v177 = vadd.f32 %v110, %v175
    %v178 = vadd.f32 %v111, %v176
    %s179 = scalar_lea.vmem %s1, 16
    %v180 = vld [vmem:[%s179] sm:$0xf]
    %v181 = vld [vmem:[%s179 + $0x4] sm:$0xf]
    %v184 = vunpack.c.l.b16 %v180
    %v185 = vunpack.c.l.b16 %v181
    %v186 = vpack.c.b16 %v185, %v184
    %v188 = vsel %vm52, %v186, 0
    %190 = vmatprep.subr.bf16.mxu0 0
    %191 = vmatpush1.bf16.msra.mxu0 0
    %192 = vmatprep.subr.bf16.mxu0 0
    %193 = vmatpush1.bf16.msra.mxu0 0
    %194 = vmatprep.subr.bf16.mxu0 0
    %195 = vmatpush1.bf16.msra.mxu0 0
    %196 = vmatprep.subr.bf16.mxu0 0
    %197 = vmatpush1.bf16.msra.mxu0 0
    %198 = vmatprep.subr.bf16.mxu0 0
    %199 = vmatpush1.bf16.msra.mxu0 0
    %200 = vmatprep.subr.bf16.mxu0 0
    %201 = vmatpush1.bf16.msra.mxu0 0
    %202 = vmatprep.subr.bf16.mxu0 0
    %203 = vmatpush1.bf16.msra.mxu0 %v49
    %204 = vmatprep.subr.bf16.mxu0 0
    %205 = vmatpush1.bf16.msra.mxu0 %v48
    %206 = vmatprep.subr.bf16.mxu0 0
    %207 = vmatpush2.bf16.msra.mxu0 0
    %208 = vmatprep.subr.bf16.mxu0 0
    %209 = vmatpush2.bf16.msra.mxu0 0
    %210 = vmatprep.subr.bf16.mxu0 0
    %211 = vmatpush2.bf16.msra.mxu0 0
    %212 = vmatprep.subr.bf16.mxu0 0
    %213 = vmatpush2.bf16.msra.mxu0 0
    %214 = vmatprep.subr.bf16.mxu0 0
    %215 = vmatpush2.bf16.msra.mxu0 0
    %216 = vmatprep.subr.bf16.mxu0 0
    %217 = vmatpush2.bf16.msra.mxu0 0
    %218 = vmatprep.subr.bf16.mxu0 0
    %219 = vmatpush2.bf16.msra.mxu0 0
    %220 = vmatprep.subr.bf16.mxu0 0
    %221 = vmatpush2.bf16.msra.mxu0 0
    %222 = vmatprep.mubr.bf16.mxu0 0
    %223 = vmatmul.mubr.bf16.gmra.mxu0 %v188
    %v224 = vpop.f32.mrf.mxu0
    %v225 = vadd.f32 0.0, %v224
    %v226 = vpop.f32.mrf.mxu0
    %v227 = vpop.f32.mrf.mxu0
    %v228 = vadd.f32 0.0, %v227
    %v229 = vpop.f32.mrf.mxu0
    %230 = vdwg.mxu0
    %v231 = vpack.c.bf16 %v228, %v225
    %v233 = vunpack.c.l.b16 %v231
    %v234 = vunpack.c.h.b16 %v231
    %v235 = vpack.c.b16 %v233, %v233
    %v236 = vpack.c.b16 %v234, %v234
    %s239 = scalar_lea.vmem [#allocation4], 16
    %240 = vst.msk [vmem:[%s239] sm:$0xf] %vm105, %v235
    %241 = vst.msk [vmem:[%s239 + $0x4] sm:$0xf] %vm105, %v236
    %v242 = vunpack.c.l.bf16 %v180
    %v243 = vunpack.c.l.bf16 %v181
    %v244 = vadd.f32 %v177, %v242
    %v245 = vadd.f32 %v178, %v243
    %s246 = scalar_lea.vmem %s1, 24
    %v247 = vld [vmem:[%s246] sm:$0xf]
    %v248 = vld [vmem:[%s246 + $0x4] sm:$0xf]
    %v251 = vunpack.c.l.b16 %v247
    %v252 = vunpack.c.l.b16 %v248
    %v253 = vpack.c.b16 %v252, %v251
    %v255 = vsel %vm52, %v253, 0
    %257 = vmatprep.subr.bf16.mxu0 0
    %258 = vmatpush1.bf16.msra.mxu0 0
    %259 = vmatprep.subr.bf16.mxu0 0
    %260 = vmatpush1.bf16.msra.mxu0 0
    %261 = vmatprep.subr.bf16.mxu0 0
    %262 = vmatpush1.bf16.msra.mxu0 0
    %263 = vmatprep.subr.bf16.mxu0 0
    %264 = vmatpush1.bf16.msra.mxu0 0
    %265 = vmatprep.subr.bf16.mxu0 0
    %266 = vmatpush1.bf16.msra.mxu0 0
    %267 = vmatprep.subr.bf16.mxu0 0
    %268 = vmatpush1.bf16.msra.mxu0 0
    %269 = vmatprep.subr.bf16.mxu0 0
    %270 = vmatpush1.bf16.msra.mxu0 %v49
    %271 = vmatprep.subr.bf16.mxu0 0
    %272 = vmatpush1.bf16.msra.mxu0 %v48
    %273 = vmatprep.subr.bf16.mxu0 0
    %274 = vmatpush2.bf16.msra.mxu0 0
    %275 = vmatprep.subr.bf16.mxu0 0
    %276 = vmatpush2.bf16.msra.mxu0 0
    %277 = vmatprep.subr.bf16.mxu0 0
    %278 = vmatpush2.bf16.msra.mxu0 0
    %279 = vmatprep.subr.bf16.mxu0 0
    %280 = vmatpush2.bf16.msra.mxu0 0
    %281 = vmatprep.subr.bf16.mxu0 0
    %282 = vmatpush2.bf16.msra.mxu0 0
    %283 = vmatprep.subr.bf16.mxu0 0
    %284 = vmatpush2.bf16.msra.mxu0 0
    %285 = vmatprep.subr.bf16.mxu0 0
    %286 = vmatpush2.bf16.msra.mxu0 0
    %287 = vmatprep.subr.bf16.mxu0 0
    %288 = vmatpush2.bf16.msra.mxu0 0
    %289 = vmatprep.mubr.bf16.mxu0 0
    %290 = vmatmul.mubr.bf16.gmra.mxu0 %v255
    %v291 = vpop.f32.mrf.mxu0
    %v292 = vadd.f32 0.0, %v291
    %v293 = vpop.f32.mrf.mxu0
    %v294 = vpop.f32.mrf.mxu0
    %v295 = vadd.f32 0.0, %v294
    %v296 = vpop.f32.mrf.mxu0
    %297 = vdwg.mxu0
    %v298 = vpack.c.bf16 %v295, %v292
    %v300 = vunpack.c.l.b16 %v298
    %v301 = vunpack.c.h.b16 %v298
    %v302 = vpack.c.b16 %v300, %v300
    %v303 = vpack.c.b16 %v301, %v301
    %s306 = scalar_lea.vmem [#allocation4], 24
    %307 = vst.msk [vmem:[%s306] sm:$0xf] %vm105, %v302
    %308 = vst.msk [vmem:[%s306 + $0x4] sm:$0xf] %vm105, %v303
    %v309 = vunpack.c.l.bf16 %v247
    %v310 = vunpack.c.l.bf16 %v248
    %v311 = vadd.f32 %v244, %v309
    %v312 = vadd.f32 %v245, %v310
    %s313 = scalar_lea.vmem %s1, 32
    %v314 = vld [vmem:[%s313] sm:$0xf]
    %v315 = vld [vmem:[%s313 + $0x4] sm:$0xf]
    %v318 = vunpack.c.l.b16 %v314
    %v319 = vunpack.c.l.b16 %v315
    %v320 = vpack.c.b16 %v319, %v318
    %v322 = vsel %vm52, %v320, 0
    %324 = vmatprep.subr.bf16.mxu0 0
    %325 = vmatpush1.bf16.msra.mxu0 0
    %326 = vmatprep.subr.bf16.mxu0 0
    %327 = vmatpush1.bf16.msra.mxu0 0
    %328 = vmatprep.subr.bf16.mxu0 0
    %329 = vmatpush1.bf16.msra.mxu0 0
    %330 = vmatprep.subr.bf16.mxu0 0
    %331 = vmatpush1.bf16.msra.mxu0 0
    %332 = vmatprep.subr.bf16.mxu0 0
    %333 = vmatpush1.bf16.msra.mxu0 0
    %334 = vmatprep.subr.bf16.mxu0 0
    %335 = vmatpush1.bf16.msra.mxu0 0
    %336 = vmatprep.subr.bf16.mxu0 0
    %337 = vmatpush1.bf16.msra.mxu0 %v49
    %338 = vmatprep.subr.bf16.mxu0 0
    %339 = vmatpush1.bf16.msra.mxu0 %v48
    %340 = vmatprep.subr.bf16.mxu0 0
    %341 = vmatpush2.bf16.msra.mxu0 0
    %342 = vmatprep.subr.bf16.mxu0 0
    %343 = vmatpush2.bf16.msra.mxu0 0
    %344 = vmatprep.subr.bf16.mxu0 0
    %345 = vmatpush2.bf16.msra.mxu0 0
    %346 = vmatprep.subr.bf16.mxu0 0
    %347 = vmatpush2.bf16.msra.mxu0 0
    %348 = vmatprep.subr.bf16.mxu0 0
    %349 = vmatpush2.bf16.msra.mxu0 0
    %350 = vmatprep.subr.bf16.mxu0 0
    %351 = vmatpush2.bf16.msra.mxu0 0
    %352 = vmatprep.subr.bf16.mxu0 0
    %353 = vmatpush2.bf16.msra.mxu0 0
    %354 = vmatprep.subr.bf16.mxu0 0
    %355 = vmatpush2.bf16.msra.mxu0 0
    %356 = vmatprep.mubr.bf16.mxu0 0
    %357 = vmatmul.mubr.bf16.gmra.mxu0 %v322
    %v358 = vpop.f32.mrf.mxu0
    %v359 = vadd.f32 0.0, %v358
    %v360 = vpop.f32.mrf.mxu0
    %v361 = vpop.f32.mrf.mxu0
    %v362 = vadd.f32 0.0, %v361
    %v363 = vpop.f32.mrf.mxu0
    %364 = vdwg.mxu0
    %v365 = vpack.c.bf16 %v362, %v359
    %v367 = vunpack.c.l.b16 %v365
    %v368 = vunpack.c.h.b16 %v365
    %v369 = vpack.c.b16 %v367, %v367
    %v370 = vpack.c.b16 %v368, %v368
    %s373 = scalar_lea.vmem [#allocation4], 32
    %374 = vst.msk [vmem:[%s373] sm:$0xf] %vm105, %v369
    %375 = vst.msk [vmem:[%s373 + $0x4] sm:$0xf] %vm105, %v370
    %v376 = vunpack.c.l.bf16 %v314
    %v377 = vunpack.c.l.bf16 %v315
    %v378 = vadd.f32 %v311, %v376
    %v379 = vadd.f32 %v312, %v377
    %v380 = vld [vmem:[%s2] sm:$0xff]
    %v381 = vld [vmem:[%s2 + $0x8] sm:$0xff]
    %383 = vset.pattern.permute.xlu0 0
    %384 = vperm.xlu0 %383, %v380
    %v385 = vpop.permute.xlu0 %384
    %388 = vset.pattern.permute.xlu0 0
    %389 = vperm.xlu0 %388, %v381
    %v390 = vpop.permute.xlu0 %389
    %v392 = vmul.f32 %v378, %v385
    %v393 = vmul.f32 %v379, %v390
    %v394 = vld [vmem:[%s0] sm:$0xf]
    %v395 = vld [vmem:[%s0 + $0x4] sm:$0xf]
    %v396 = vpack.c.bf16 %v393, %v392
    %v401 = vunpack.c.l.b16 %v29
    %v402 = vunpack.c.l.b16 %v30
    %v403 = vunpack.c.l.b16 %v31
    %v404 = vunpack.c.l.b16 %v32
    %v405 = vpack.c.b16 %v402, %v401
    %v406 = vpack.c.b16 %v404, %v403
    %v410 = vsel %vm52, %v396, 0
    %412 = vmatprep.subr.bf16.mxu0 0
    %413 = vmatpush1.bf16.msra.mxu0 0
    %414 = vmatprep.subr.bf16.mxu0 0
    %415 = vmatpush1.bf16.msra.mxu0 0
    %416 = vmatprep.subr.bf16.mxu0 0
    %417 = vmatpush1.bf16.msra.mxu0 0
    %418 = vmatprep.subr.bf16.mxu0 0
    %419 = vmatpush1.bf16.msra.mxu0 0
    %420 = vmatprep.subr.bf16.mxu0 0
    %421 = vmatpush1.bf16.msra.mxu0 0
    %422 = vmatprep.subr.bf16.mxu0 0
    %423 = vmatpush1.bf16.msra.mxu0 0
    %424 = vmatprep.subr.bf16.mxu0 0
    %425 = vmatpush1.bf16.msra.mxu0 %v406
    %426 = vmatprep.subr.bf16.mxu0 0
    %427 = vmatpush1.bf16.msra.mxu0 %v405
    %428 = vmatprep.subr.bf16.mxu0 0
    %429 = vmatpush2.bf16.msra.mxu0 0
    %430 = vmatprep.subr.bf16.mxu0 0
    %431 = vmatpush2.bf16.msra.mxu0 0
    %432 = vmatprep.subr.bf16.mxu0 0
    %433 = vmatpush2.bf16.msra.mxu0 0
    %434 = vmatprep.subr.bf16.mxu0 0
    %435 = vmatpush2.bf16.msra.mxu0 0
    %436 = vmatprep.subr.bf16.mxu0 0
    %437 = vmatpush2.bf16.msra.mxu0 0
    %438 = vmatprep.subr.bf16.mxu0 0
    %439 = vmatpush2.bf16.msra.mxu0 0
    %440 = vmatprep.subr.bf16.mxu0 0
    %441 = vmatpush2.bf16.msra.mxu0 0
    %442 = vmatprep.subr.bf16.mxu0 0
    %443 = vmatpush2.bf16.msra.mxu0 0
    %444 = vmatprep.mubr.bf16.mxu0 0
    %445 = vmatmul.mubr.bf16.gmra.mxu0 %v410
    %v446 = vpop.f32.mrf.mxu0
    %v447 = vadd.f32 0.0, %v446
    %v448 = vpop.f32.mrf.mxu0
    %v449 = vpop.f32.mrf.mxu0
    %v450 = vadd.f32 0.0, %v449
    %v451 = vpop.f32.mrf.mxu0
    %452 = vdwg.mxu0
    %v455 = vunpack.c.l.b16 %v394
    %v456 = vunpack.c.l.b16 %v395
    %v457 = vpack.c.b16 %v456, %v455
    %v459 = vsel %vm52, %v457, 0
    %461 = vmatprep.subr.bf16.mxu0 0
    %462 = vmatpush1.bf16.msra.mxu0 0
    %463 = vmatprep.subr.bf16.mxu0 0
    %464 = vmatpush1.bf16.msra.mxu0 0
    %465 = vmatprep.subr.bf16.mxu0 0
    %466 = vmatpush1.bf16.msra.mxu0 0
    %467 = vmatprep.subr.bf16.mxu0 0
    %468 = vmatpush1.bf16.msra.mxu0 0
    %469 = vmatprep.subr.bf16.mxu0 0
    %470 = vmatpush1.bf16.msra.mxu0 0
    %471 = vmatprep.subr.bf16.mxu0 0
    %472 = vmatpush1.bf16.msra.mxu0 0
    %473 = vmatprep.subr.bf16.mxu0 0
    %474 = vmatpush1.bf16.msra.mxu0 %v49
    %475 = vmatprep.subr.bf16.mxu0 0
    %476 = vmatpush1.bf16.msra.mxu0 %v48
    %477 = vmatprep.subr.bf16.mxu0 0
    %478 = vmatpush2.bf16.msra.mxu0 0
    %479 = vmatprep.subr.bf16.mxu0 0
    %480 = vmatpush2.bf16.msra.mxu0 0
    %481 = vmatprep.subr.bf16.mxu0 0
    %482 = vmatpush2.bf16.msra.mxu0 0
    %483 = vmatprep.subr.bf16.mxu0 0
    %484 = vmatpush2.bf16.msra.mxu0 0
    %485 = vmatprep.subr.bf16.mxu0 0
    %486 = vmatpush2.bf16.msra.mxu0 0
    %487 = vmatprep.subr.bf16.mxu0 0
    %488 = vmatpush2.bf16.msra.mxu0 0
    %489 = vmatprep.subr.bf16.mxu0 0
    %490 = vmatpush2.bf16.msra.mxu0 0
    %491 = vmatprep.subr.bf16.mxu0 0
    %492 = vmatpush2.bf16.msra.mxu0 0
    %493 = vmatprep.mubr.bf16.mxu0 0
    %494 = vmatmul.mubr.bf16.gmra.mxu0 %v459
    %v495 = vpop.f32.mrf.mxu0
    %v496 = vadd.f32 %v447, %v495
    %v497 = vpop.f32.mrf.mxu0
    %v498 = vpop.f32.mrf.mxu0
    %v499 = vadd.f32 %v450, %v498
    %v500 = vpop.f32.mrf.mxu0
    %501 = vdwg.mxu0
    %vm502 = vcmask 130048
    %503 = vst.msk [vmem:[#allocation2] sm:$0xff] %vm502, %v496
    %504 = vst.msk [vmem:[#allocation2 + $0x8] sm:$0xff] %vm502, %v499
    // Predicated region
    $region22: #{tpu_custom_call.1} parent=1 // pred_check
      _
    $region23: #{tpu_custom_call.1} parent=1 // pred_check_branch
      %506 = sbr.rel (0) target = $region25
    $region24: #{tpu_custom_call.1} parent=1 // pred_region
      %s508 = ssub.s32 256, 256
      %509 = vsyncadd [#allocation3], %s508
      %s510 = sshll.u32 [#allocation2], 4
      %s511 = int_to_ptr.vmem [resolvable:$true] %s510
      %516 = dma.vmem_to_hbm [thread:$0]  %s511, 256, %s5, [#allocation3], 128, 128, 8
    $region25: #{tpu_custom_call.1} parent=1 // pred_fallthru
      _
    // Predicated region
    $region26: #{tpu_custom_call.1} parent=1 // pred_check
      _
    $region27: #{tpu_custom_call.1} parent=1 // pred_check_branch
      %518 = sbr.rel (0) target = $region29
    $region28: #{tpu_custom_call.1} parent=1 // pred_region
      %s520 = ssub.s32 640, 640
      %521 = vsyncadd [#allocation5], %s520
      %s522 = sshll.u32 [#allocation4], 4
      %s523 = int_to_ptr.vmem [resolvable:$true] %s522
      %528 = dma.vmem_to_hbm [thread:$0]  %s523, 640, %s6, [#allocation5], 64, 64, 4
    $region29: #{tpu_custom_call.1} parent=1 // pred_fallthru
      _
    // Predicated region
    $region30: #{tpu_custom_call.1} parent=1 // pred_check
      _
    $region31: #{tpu_custom_call.1} parent=1 // pred_check_branch
      %530 = sbr.rel (0) target = $region33
    $region32: #{tpu_custom_call.1} parent=1 // pred_region
      %531 = dma.done [#allocation3], 256
    $region33: #{tpu_custom_call.1} parent=1 // pred_fallthru
      _
    // Predicated region
    $region34: #{tpu_custom_call.1} parent=1 // pred_check
      _
    $region35: #{tpu_custom_call.1} parent=1 // pred_check_branch
      %533 = sbr.rel (0) target = $region37
    $region36: #{tpu_custom_call.1} parent=1 // pred_region
      %534 = dma.done [#allocation5], 640
    $region37: #{tpu_custom_call.1} parent=1 // pred_fallthru
      _
    %535 = vsyncpa [#allocation3], 1
    %536 = vsyncpa [#allocation5], 1

</llo_original>
